<compile_context>
chip_gen: v7x
topology: tpu7x:2x2x1
jax: 0.10.0
libtpu: 0.0.40
codegen_flags: <defaults>
</compile_context>

<pallas_src>
import math

import jax
import jax.numpy as jnp
from jax.experimental import pallas as pl
from jax.experimental.pallas import tpu as pltpu

SAW_K = 4          # stand-in for os.environ['SAW_K']
OUT_FEATURES = 32  # D
CHANNEL_FIRST = False


# ------------------------------------------------------------- helpers -------
def _round_up(n, m):
    return -(-n // m) * m


def _min_sublane(dtype):
    """Minimum sublane tile for the dtype: (8,128) f32, (16,128) bf16, (32,128) int8."""
    return {4: 8, 2: 16, 1: 32}.get(jnp.dtype(dtype).itemsize, 8)


def _block_diag(block, pack, dtype):
    """pack copies of `block` on the diagonal -> (pack*D, pack*D), cast to dtype."""
    D = block.shape[0]
    if pack == 1:
        return block.astype(dtype)
    out = jnp.zeros((pack * D, pack * D), jnp.float32)
    for j in range(pack):
        out = out.at[j * D:(j + 1) * D, j * D:(j + 1) * D].set(block)
    return out.astype(dtype)


def _pack_rows(x, tile_rows):
    """Flatten (..., D) -> (N, D), pack `pack` tokens per 128-lane row, pad rows
    only to the dtype's minimum sublane tile.  Returns (packed, pack, tile, N)."""
    shape = x.shape
    D = shape[-1]
    N = math.prod(shape[:-1])
    pack = 128 // D if (D <= 128 and 128 % D == 0) else 1
    L = pack * D
    min_sub = _min_sublane(x.dtype)
    Np = -(-N // pack)                                  # packed rows of real data
    Np_pad = _round_up(max(Np, 1), min_sub)             # minimal pad (no tile-multiple pad)
    # Cap tile at ~half the rows so the 'parallel' grid has >=2 steps when possible
    # (v7x has 2 TensorCores); always a multiple of the dtype's sublane tile.
    half = max(min_sub, _round_up(-(-Np_pad // 2), min_sub))
    tile = max(min_sub, _round_up(min(tile_rows, half), min_sub))
    x2 = x.reshape(N, D)
    pad = Np_pad * pack - N
    if pad:
        x2 = jnp.pad(x2, ((0, pad), (0, 0)))            # only when N is misaligned
    return x2.reshape(Np_pad, L), pack, tile, N


def _unpack_rows(out_packed, shape, N):
    D = shape[-1]
    return out_packed.reshape(-1, D)[:N].reshape(shape)


# ------------------------------------------------------------------ 'lrn' ----
def _lrn_kernel(x_ref, w_ref, ones_ref, o_ref):
    x = x_ref[...]                                                            # (tile, L)
    # fused y = x @ (P^T Q^T), applied per 32-lane token via block-diag W (bf16 MXU)
    y = jnp.dot(x.astype(jnp.bfloat16), w_ref[...],
                preferred_element_type=jnp.float32)                           # (tile, L) f32
    # segmented ||y||^2 per token, broadcast across its 32 lanes (bf16 ones matmul)
    n2 = jnp.dot((y * y).astype(jnp.bfloat16), ones_ref[...],
                 preferred_element_type=jnp.float32)                          # (tile, L)
    inv = pl.reciprocal(1.0 + jnp.sqrt(n2), approx=True)                      # EUP slot
    o_ref[...] = ((y * inv + 1.0) * x.astype(jnp.float32)).astype(o_ref.dtype)


def saw_lrn(x, p_weight, q_weight, *, tile_rows=4096):
    """x: (..., D); p_weight: (k, D) [saw_P.weight]; q_weight: (D, k) [saw_Q.weight]."""
    shape = x.shape
    D = shape[-1]
    # Fuse the two projections once in the wrapper: y = x @ P^T @ Q^T = x @ W
    W = p_weight.T.astype(jnp.float32) @ q_weight.T.astype(jnp.float32)       # (D, D)

    xp, pack, tile, N = _pack_rows(x, tile_rows)
    Np_pad, L = xp.shape
    W_bd = _block_diag(W, pack, jnp.bfloat16)                                 # (L, L) bf16
    ones_bd = _block_diag(jnp.ones((D, D), jnp.float32), pack, jnp.bfloat16)  # (L, L) bf16
    grid0 = -(-Np_pad // tile)                                                # cdiv, partial tail ok

    itemsize = jnp.dtype(x.dtype).itemsize
    bytes_accessed = 2 * Np_pad * L * itemsize + 2 * L * L * 2
    flops = 2 * 2 * Np_pad * L * L
    out = pl.pallas_call(
        _lrn_kernel,
        out_shape=jax.ShapeDtypeStruct((Np_pad, L), x.dtype),
        grid_spec=pltpu.PrefetchScalarGridSpec(
            num_scalar_prefetch=0,
            grid=(grid0,),
            in_specs=[
                pl.BlockSpec((tile, L), lambda i: (i, 0)),
                pl.BlockSpec((L, L), lambda i: (0, 0)),   # resident bf16 weights
                pl.BlockSpec((L, L), lambda i: (0, 0)),   # resident bf16 ones mask
            ],
            out_specs=pl.BlockSpec((tile, L), lambda i: (i, 0)),
        ),
        compiler_params=pltpu.CompilerParams(
            dimension_semantics=("parallel",),
            vmem_limit_bytes=32 * 1024 * 1024),
        cost_estimate=pl.CostEstimate(flops=flops,
                                      transcendentals=2 * Np_pad * L,
                                      bytes_accessed=bytes_accessed),
    )(xp, W_bd, ones_bd)
    return _unpack_rows(out, shape, N)


# ----------------------------------------------------------------- 'roll' ----
def _roll_kernel(x_ref, a_ref, o_ref):
    x = x_ref[...]                                                            # (tile, L)
    factor = 1.0 + jnp.dot(x.astype(jnp.bfloat16), a_ref[...],
                           preferred_element_type=jnp.float32)
    o_ref[...] = (factor * x.astype(jnp.float32)).astype(o_ref.dtype)


def saw_roll(x, thetas, *, channel_first=False, tile_rows=4096):
    """x: (..., D); thetas: (K, D) stacked saw_theta_i.
    channel_first=True rolls/scales over axis 1 (handled by a wrapper transpose)."""
    if channel_first:
        x = jnp.moveaxis(x, 1, -1)
    shape = x.shape
    D = shape[-1]
    K = thetas.shape[0]

    # Fold all K rolls into one (D, D) matrix:
    #   A[(d - (i+1)) % D, d] += theta_i[d]   =>   factor = 1 + x @ A
    cols = jnp.arange(D)
    A = jnp.zeros((D, D), jnp.float32)
    for i in range(K):
        rows = (cols - (i + 1)) % D
        A = A.at[rows, cols].add(thetas[i].astype(jnp.float32))

    xp, pack, tile, N = _pack_rows(x, tile_rows)
    Np_pad, L = xp.shape
    A_bd = _block_diag(A, pack, jnp.bfloat16)                                 # (L, L) bf16
    grid0 = -(-Np_pad // tile)

    itemsize = jnp.dtype(x.dtype).itemsize
    bytes_accessed = 2 * Np_pad * L * itemsize + L * L * 2
    flops = 2 * Np_pad * L * L
    out = pl.pallas_call(
        _roll_kernel,
        out_shape=jax.ShapeDtypeStruct((Np_pad, L), x.dtype),
        grid_spec=pltpu.PrefetchScalarGridSpec(
            num_scalar_prefetch=0,
            grid=(grid0,),
            in_specs=[
                pl.BlockSpec((tile, L), lambda i: (i, 0)),
                pl.BlockSpec((L, L), lambda i: (0, 0)),   # resident bf16 weights
            ],
            out_specs=pl.BlockSpec((tile, L), lambda i: (i, 0)),
        ),
        compiler_params=pltpu.CompilerParams(
            dimension_semantics=("parallel",),
            vmem_limit_bytes=32 * 1024 * 1024),
        cost_estimate=pl.CostEstimate(flops=flops,
                                      transcendentals=0,
                                      bytes_accessed=bytes_accessed),
    )(xp, A_bd)
    out = _unpack_rows(out, shape, N)
    if channel_first:
        out = jnp.moveaxis(out, -1, 1)
    return out


# ----------------------------------------------------------------- refs ------
def ref_lrn(x, p_weight, q_weight):
    x = x.astype(jnp.float32)
    h = x @ p_weight.T
    y = h @ q_weight.T
    norm = jnp.sqrt(jnp.sum(y * y, axis=-1, keepdims=True))
    y = y / (1.0 + norm)
    return (y + 1.0) * x


def ref_roll(x, thetas):
    x = x.astype(jnp.float32)
    factor = jnp.ones_like(x)
    for i in range(thetas.shape[0]):
        factor = factor + thetas[i].reshape((1,) * (x.ndim - 1) + (-1,)) * jnp.roll(x, i + 1, axis=-1)
    return factor * x


# ----------------------------------------------------------------- main ------
if __name__ == "__main__":
    D, K = OUT_FEATURES, SAW_K

    key = jax.random.PRNGKey(0)
    kx, kp, kq, kt, kx2 = jax.random.split(key, 5)

    # saw_P.weight: (k, D), kaiming_uniform(a=sqrt(5)) -> U(-1/sqrt(D), 1/sqrt(D))
    bound = 1.0 / math.sqrt(D)
    p_weight = jax.random.uniform(kp, (K, D), minval=-bound, maxval=bound, dtype=jnp.float32)
    # saw_Q.weight: (D, k)  (module zero-inits -> identity; random here to exercise kernel)
    q_weight = jax.random.uniform(kq, (D, K), minval=-0.5, maxval=0.5, dtype=jnp.float32)
    # saw_theta_i: (D,) each, stacked -> (K, D)  (module zero-inits; random here)
    thetas = 0.1 * jax.random.normal(kt, (K, D), dtype=jnp.float32)

    # --- small shape (matches the module usage: batch=2, seq=8, hidden=32) ---
    B, S = 2, 8
    x = jax.random.normal(kx, (B, S, D), dtype=jnp.float32)

    out_lrn = jax.block_until_ready(saw_lrn(x, p_weight, q_weight))
    exp_lrn = ref_lrn(x, p_weight, q_weight)
    assert out_lrn.shape == x.shape and out_lrn.dtype == x.dtype
    # bf16 MXU operands + approx EUP reciprocal + prefused W -> looser tolerance
    assert jnp.allclose(out_lrn, exp_lrn, atol=1e-2, rtol=1e-2), "lrn mismatch"

    out_roll = jax.block_until_ready(saw_roll(x, thetas, channel_first=CHANNEL_FIRST))
    exp_roll = ref_roll(x, thetas)
    assert out_roll.shape == x.shape and out_roll.dtype == x.dtype
    assert jnp.allclose(out_roll, exp_roll, atol=1e-2, rtol=1e-2), "roll mismatch"

    # --- mid shape: multi-step grid + minimal row pad + partial (masked) tail block ---
    xb = jax.random.normal(kx2, (2, 300, D), dtype=jnp.float32)
    out_lrn_b = jax.block_until_ready(saw_lrn(xb, p_weight, q_weight, tile_rows=64))
    assert jnp.allclose(out_lrn_b, ref_lrn(xb, p_weight, q_weight), atol=1e-2, rtol=1e-2), \
        "lrn tiled mismatch"
    out_roll_b = jax.block_until_ready(saw_roll(xb, thetas, tile_rows=64))
    assert jnp.allclose(out_roll_b, ref_roll(xb, thetas), atol=1e-2, rtol=1e-2), \
        "roll tiled mismatch"

    # --- bf16 activations: exercises the 16-row minimum sublane tile path ---
    xh = xb.astype(jnp.bfloat16)
    out_lrn_h = jax.block_until_ready(saw_lrn(xh, p_weight, q_weight))
    assert out_lrn_h.dtype == jnp.bfloat16 and out_lrn_h.shape == xh.shape
    assert jnp.allclose(out_lrn_h.astype(jnp.float32), ref_lrn(xh, p_weight, q_weight),
                        atol=5e-2, rtol=5e-2), "lrn bf16 mismatch"
    out_roll_h = jax.block_until_ready(saw_roll(xh, thetas))
    assert out_roll_h.dtype == jnp.bfloat16 and out_roll_h.shape == xh.shape
    assert jnp.allclose(out_roll_h.astype(jnp.float32), ref_roll(xh, thetas),
                        atol=5e-2, rtol=5e-2), "roll bf16 mismatch"

    print("KERNEL_OK")
</pallas_src>

<mosaic_0001>
module attributes {stable_mosaic.version = 11 : i64} {
  func.func @_lrn_kernel(%arg0: i32, %arg1: memref<8x128xf32, #tpu.memory_space<vmem>>, %arg2: memref<128x128xbf16, #tpu.memory_space<vmem>>, %arg3: memref<128x128xbf16, #tpu.memory_space<vmem>>, %arg4: memref<8x128xf32, #tpu.memory_space<vmem>>) attributes {dimension_semantics = [#tpu.dimension_semantics<parallel>], iteration_bounds = array<i64: 1>, scalar_prefetch = 0 : i64, scratch_operands = 0 : i64, tpu.core_type = #tpu.core_type<tc>, window_params = [{transform_indices = @transform_0, window_bounds = array<i64: 8, 128>}, {pipeline_mode = #tpu.pipeline_mode<synchronous>, transform_indices = @transform_1, window_bounds = array<i64: 128, 128>}, {pipeline_mode = #tpu.pipeline_mode<synchronous>, transform_indices = @transform_2, window_bounds = array<i64: 128, 128>}, {transform_indices = @transform_3, window_bounds = array<i64: 8, 128>}]} {
    %c0 = arith.constant 0 : index
    %c0_0 = arith.constant 0 : index
    %0 = vector.load %arg1[%c0, %c0_0] : memref<8x128xf32, #tpu.memory_space<vmem>>, vector<8x128xf32>
    %1 = arith.truncf %0 : vector<8x128xf32> to vector<8x128xbf16>
    %c0_1 = arith.constant 0 : index
    %c0_2 = arith.constant 0 : index
    %2 = vector.load %arg2[%c0_1, %c0_2] : memref<128x128xbf16, #tpu.memory_space<vmem>>, vector<128x128xbf16>
    %cst = arith.constant dense<0.000000e+00> : vector<8x128xf32>
    %3 = tpu.matmul %1, %2, %cst {dimension_numbers = #tpu.dot_dimension_numbers<[1], [0], [0], [1], [0, 0, 1, 1], [], []>} : vector<8x128xbf16>, vector<128x128xbf16>, vector<8x128xf32> -> vector<8x128xf32>
    %4 = arith.mulf %3, %3 : vector<8x128xf32>
    %5 = arith.truncf %4 : vector<8x128xf32> to vector<8x128xbf16>
    %c0_3 = arith.constant 0 : index
    %c0_4 = arith.constant 0 : index
    %6 = vector.load %arg3[%c0_3, %c0_4] : memref<128x128xbf16, #tpu.memory_space<vmem>>, vector<128x128xbf16>
    %cst_5 = arith.constant dense<0.000000e+00> : vector<8x128xf32>
    %7 = tpu.matmul %5, %6, %cst_5 {dimension_numbers = #tpu.dot_dimension_numbers<[1], [0], [0], [1], [0, 0, 1, 1], [], []>} : vector<8x128xbf16>, vector<128x128xbf16>, vector<8x128xf32> -> vector<8x128xf32>
    %8 = math.sqrt %7 : vector<8x128xf32>
    %cst_6 = arith.constant 1.000000e+00 : f32
    %9 = vector.broadcast %cst_6 : f32 to vector<8x128xf32>
    %10 = arith.addf %9, %8 : vector<8x128xf32>
    %11 = tpu.reciprocal %10 {approx = true} : vector<8x128xf32> -> vector<8x128xf32>
    %12 = arith.mulf %3, %11 : vector<8x128xf32>
    %cst_7 = arith.constant 1.000000e+00 : f32
    %13 = vector.broadcast %cst_7 : f32 to vector<8x128xf32>
    %14 = arith.addf %12, %13 : vector<8x128xf32>
    %15 = arith.mulf %14, %0 : vector<8x128xf32>
    %c0_8 = arith.constant 0 : index
    %c0_9 = arith.constant 0 : index
    %16 = vector.load %arg4[%c0_8, %c0_9] : memref<8x128xf32, #tpu.memory_space<vmem>>, vector<8x128xf32>
    tpu.vector_store %arg4[%c0_8, %c0_9], %15 {strides = array<i32>} : memref<8x128xf32, #tpu.memory_space<vmem>>, vector<8x128xf32>,
    return
  }
  func.func @transform_0(%arg0: i32) -> (i32, i32) {
    %c0_i32 = arith.constant 0 : i32
    %c0_i32_0 = arith.constant 0 : i32
    return %arg0, %c0_i32 : i32, i32
  }
  func.func @transform_1(%arg0: i32) -> (i32, i32) {
    %c0_i32 = arith.constant 0 : i32
    %c0_i32_0 = arith.constant 0 : i32
    %c0_i32_1 = arith.constant 0 : i32
    return %c0_i32, %c0_i32_0 : i32, i32
  }
  func.func @transform_2(%arg0: i32) -> (i32, i32) {
    %c0_i32 = arith.constant 0 : i32
    %c0_i32_0 = arith.constant 0 : i32
    %c0_i32_1 = arith.constant 0 : i32
    return %c0_i32, %c0_i32_0 : i32, i32
  }
  func.func @transform_3(%arg0: i32) -> (i32, i32) {
    %c0_i32 = arith.constant 0 : i32
    %c0_i32_0 = arith.constant 0 : i32
    return %arg0, %c0_i32 : i32, i32
  }
}

</mosaic_0001>

<llo_original>
// kernel: tpu_custom_call.1
$region0: #{tpu_custom_call.1}
  #allocation0 [shape = 'u32[]', space=smem, size = 0x4, offset = 0x4, fixed_abs, tag = 'smem constant byte address 0x4 - core index']
  #allocation1 [shape = 'u32[144,128]{1,0:T(1,128)}', space=vmem, size = 0x12000, scoped, tag = 'internal scratch']
  %s0 = inlined_call_operand.hbm [shape: f32[8,128], index: 0, kind: input, shape index: {}]
  %s1 = inlined_call_operand.hbm [shape: bf16[128,128], index: 1, kind: input, shape index: {}]
  %s2 = inlined_call_operand.hbm [shape: bf16[128,128], index: 2, kind: input, shape index: {}]
  %s3 = inlined_call_operand.hbm [shape: f32[8,128], index: 3, kind: output, shape index: {}]
  %s4 = sld [smem:[#allocation0]]
  $region34: #{tpu_custom_call.1} parent=0
    _
  %s6 = ssub.s32 1, %s4
  %s7 = scalar_select 0, %s6, %s4
  $region1: #{tpu_custom_call.1} parent=0
    #allocation2 [shape = 'u8[4096]{0}', space=vmem, size = 0x1000, scoped, tag = 'input window, operand 0, single buffered']
    #allocation3 [shape = 's32[1]{0}', space=sflag, size = 0x4, scoped, tag = 'scoped memory for tpu_custom_call.1']
    #allocation4 [shape = 's32[1]{0}', space=sflag, size = 0x4, scoped, tag = 'scoped memory for tpu_custom_call.1']
    #allocation5 [shape = 'u8[32768]{0}', space=vmem, size = 0x8000, scoped, tag = 'input window, operand 1, single buffered']
    #allocation6 [shape = 's32[1]{0}', space=sflag, size = 0x4, scoped, tag = 'scoped memory for tpu_custom_call.1']
    #allocation7 [shape = 'u8[32768]{0}', space=vmem, size = 0x8000, scoped, tag = 'input window, operand 2, single buffered']
    #allocation8 [shape = 'u8[4096]{0}', space=vmem, size = 0x1000, scoped, tag = 'output window, operand 0, single buffered']
    %8 = vsyncpa [#allocation3], 0
    %9 = vsyncpa [#allocation6], 0
    %10 = vsyncpa [#allocation4], 0
    // Predicated region
    $region2: #{tpu_custom_call.1} parent=1 // pred_check
      _
    $region3: #{tpu_custom_call.1} parent=1 // pred_check_branch
      %12 = sbr.rel (0) target = $region5
    $region4: #{tpu_custom_call.1} parent=1 // pred_region
      %s14 = ssub.s32 128, 128
      %15 = vsyncadd [#allocation3], %s14
      %s17 = sshll.u32 [#allocation2], 4
      %s18 = int_to_ptr.vmem [resolvable:$true] %s17
      %20 = dma.hbm_to_vmem [thread:$0]  %s0, 128, %s18, [#allocation3]
    $region5: #{tpu_custom_call.1} parent=1 // pred_fallthru
      _
    // Predicated region
    $region6: #{tpu_custom_call.1} parent=1 // pred_check
      _
    $region7: #{tpu_custom_call.1} parent=1 // pred_check_branch
      %22 = sbr.rel (0) target = $region9
    $region8: #{tpu_custom_call.1} parent=1 // pred_region
      %s24 = ssub.s32 1024, 1024
      %25 = vsyncadd [#allocation6], %s24
      %s26 = sshll.u32 [#allocation5], 4
      %s27 = int_to_ptr.vmem [resolvable:$true] %s26
      %32 = dma.hbm_to_vmem [thread:$0]  %s1, 1024, %s27, [#allocation6], 64, 64, 4
    $region9: #{tpu_custom_call.1} parent=1 // pred_fallthru
      _
    // Predicated region
    $region10: #{tpu_custom_call.1} parent=1 // pred_check
      _
    $region11: #{tpu_custom_call.1} parent=1 // pred_check_branch
      %34 = sbr.rel (0) target = $region13
    $region12: #{tpu_custom_call.1} parent=1 // pred_region
      %s36 = ssub.s32 1024, 1024
      %37 = vsyncadd [#allocation6], %s36
      %s38 = sshll.u32 [#allocation7], 4
      %s39 = int_to_ptr.vmem [resolvable:$true] %s38
      %44 = dma.hbm_to_vmem [thread:$0]  %s2, 1024, %s39, [#allocation6], 64, 64, 4
    $region13: #{tpu_custom_call.1} parent=1 // pred_fallthru
      _
    // Predicated region
    $region14: #{tpu_custom_call.1} parent=1 // pred_check
      _
    $region15: #{tpu_custom_call.1} parent=1 // pred_check_branch
      %46 = sbr.rel (0) target = $region17
    $region16: #{tpu_custom_call.1} parent=1 // pred_region
      %47 = dma.done [#allocation3], 128
    $region17: #{tpu_custom_call.1} parent=1 // pred_fallthru
      _
    // Predicated region
    $region18: #{tpu_custom_call.1} parent=1 // pred_check
      _
    $region19: #{tpu_custom_call.1} parent=1 // pred_check_branch
      %49 = sbr.rel (0) target = $region21
    $region20: #{tpu_custom_call.1} parent=1 // pred_region
      %50 = dma.done [#allocation6], 1024
    $region21: #{tpu_custom_call.1} parent=1 // pred_fallthru
      _
    // Predicated region
    $region22: #{tpu_custom_call.1} parent=1 // pred_check
      _
    $region23: #{tpu_custom_call.1} parent=1 // pred_check_branch
      %52 = sbr.rel (0) target = $region25
    $region24: #{tpu_custom_call.1} parent=1 // pred_region
      %53 = dma.done [#allocation6], 1024
    $region25: #{tpu_custom_call.1} parent=1 // pred_fallthru
      _
    %v55 = vld [vmem:[#allocation2] sm:$0xff]
    %v56 = vpack.c.bf16 %v55, %v55
    %v57 = vld [vmem:[#allocation5] sm:$0xf]
    %v58 = vld [vmem:[#allocation5 + $0x4] sm:$0xf]
    %v59 = vld [vmem:[#allocation5 + $0x8] sm:$0xf]
    %v60 = vld [vmem:[#allocation5 + $0xc] sm:$0xf]
    %v61 = vld [vmem:[#allocation5 + $0x10] sm:$0xf]
    %v62 = vld [vmem:[#allocation5 + $0x14] sm:$0xf]
    %v63 = vld [vmem:[#allocation5 + $0x18] sm:$0xf]
    %v64 = vld [vmem:[#allocation5 + $0x1c] sm:$0xf]
    %v65 = vld [vmem:[#allocation5 + $0x20] sm:$0xf]
    %v66 = vld [vmem:[#allocation5 + $0x24] sm:$0xf]
    %v67 = vld [vmem:[#allocation5 + $0x28] sm:$0xf]
    %v68 = vld [vmem:[#allocation5 + $0x2c] sm:$0xf]
    %v69 = vld [vmem:[#allocation5 + $0x30] sm:$0xf]
    %v70 = vld [vmem:[#allocation5 + $0x34] sm:$0xf]
    %v71 = vld [vmem:[#allocation5 + $0x38] sm:$0xf]
    %v72 = vld [vmem:[#allocation5 + $0x3c] sm:$0xf]
    %v89 = vunpack.c.l.b16 %v57
    %v90 = vunpack.c.l.b16 %v58
    %v91 = vunpack.c.l.b16 %v59
    %v92 = vunpack.c.l.b16 %v60
    %v93 = vunpack.c.l.b16 %v61
    %v94 = vunpack.c.l.b16 %v62
    %v95 = vunpack.c.l.b16 %v63
    %v96 = vunpack.c.l.b16 %v64
    %v97 = vunpack.c.l.b16 %v65
    %v98 = vunpack.c.l.b16 %v66
    %v99 = vunpack.c.l.b16 %v67
    %v100 = vunpack.c.l.b16 %v68
    %v101 = vunpack.c.l.b16 %v69
    %v102 = vunpack.c.l.b16 %v70
    %v103 = vunpack.c.l.b16 %v71
    %v104 = vunpack.c.l.b16 %v72
    %v105 = vpack.c.b16 %v90, %v89
    %v106 = vpack.c.b16 %v92, %v91
    %v107 = vpack.c.b16 %v94, %v93
    %v108 = vpack.c.b16 %v96, %v95
    %v109 = vpack.c.b16 %v98, %v97
    %v110 = vpack.c.b16 %v100, %v99
    %v111 = vpack.c.b16 %v102, %v101
    %v112 = vpack.c.b16 %v104, %v103
    %121 = vmatprep.subr.bf16.mxu0 0
    %122 = vmatpush1.bf16.msra.mxu0 %v105
    %123 = vmatprep.subr.bf16.mxu0 0
    %124 = vmatpush1.bf16.msra.mxu0 %v106
    %125 = vmatprep.subr.bf16.mxu0 0
    %126 = vmatpush1.bf16.msra.mxu0 %v107
    %127 = vmatprep.subr.bf16.mxu0 0
    %128 = vmatpush1.bf16.msra.mxu0 %v108
    %129 = vmatprep.subr.bf16.mxu0 0
    %130 = vmatpush1.bf16.msra.mxu0 %v109
    %131 = vmatprep.subr.bf16.mxu0 0
    %132 = vmatpush1.bf16.msra.mxu0 %v110
    %133 = vmatprep.subr.bf16.mxu0 0
    %134 = vmatpush1.bf16.msra.mxu0 %v111
    %135 = vmatprep.subr.bf16.mxu0 0
    %136 = vmatpush1.bf16.msra.mxu0 %v112
    %137 = vmatprep.subr.bf16.mxu0 0
    %138 = vmatpush1.bf16.msra.mxu0 0
    %139 = vmatprep.subr.bf16.mxu0 0
    %140 = vmatpush1.bf16.msra.mxu0 0
    %141 = vmatprep.subr.bf16.mxu0 0
    %142 = vmatpush1.bf16.msra.mxu0 0
    %143 = vmatprep.subr.bf16.mxu0 0
    %144 = vmatpush1.bf16.msra.mxu0 0
    %145 = vmatprep.subr.bf16.mxu0 0
    %146 = vmatpush1.bf16.msra.mxu0 0
    %147 = vmatprep.subr.bf16.mxu0 0
    %148 = vmatpush1.bf16.msra.mxu0 0
    %149 = vmatprep.subr.bf16.mxu0 0
    %150 = vmatpush1.bf16.msra.mxu0 0
    %151 = vmatprep.subr.bf16.mxu0 0
    %152 = vmatpush1.bf16.msra.mxu0 0
    %153 = vmatprep.mubr.bf16.mxu0 0
    %154 = vmatmul.mubr.bf16.gmra.mrb[0].mxu0 %v56
    %v155 = vpop.f32.mrb[0].mxu0
    %v156 = vadd.f32 0.0, %v155
    %v157 = vpop.f32.mrb[0].mxu0
    %v158 = vpop.f32.mrb[0].mxu0
    %v159 = vpop.f32.mrb[0].mxu0
    %160 = vdwg.mxu0
    %v161 = vmul.f32 %v156, %v156
    %v162 = vpack.c.bf16 %v161, %v161
    %v163 = vld [vmem:[#allocation7] sm:$0xf]
    %v164 = vld [vmem:[#allocation7 + $0x4] sm:$0xf]
    %v165 = vld [vmem:[#allocation7 + $0x8] sm:$0xf]
    %v166 = vld [vmem:[#allocation7 + $0xc] sm:$0xf]
    %v167 = vld [vmem:[#allocation7 + $0x10] sm:$0xf]
    %v168 = vld [vmem:[#allocation7 + $0x14] sm:$0xf]
    %v169 = vld [vmem:[#allocation7 + $0x18] sm:$0xf]
    %v170 = vld [vmem:[#allocation7 + $0x1c] sm:$0xf]
    %v171 = vld [vmem:[#allocation7 + $0x20] sm:$0xf]
    %v172 = vld [vmem:[#allocation7 + $0x24] sm:$0xf]
    %v173 = vld [vmem:[#allocation7 + $0x28] sm:$0xf]
    %v174 = vld [vmem:[#allocation7 + $0x2c] sm:$0xf]
    %v175 = vld [vmem:[#allocation7 + $0x30] sm:$0xf]
    %v176 = vld [vmem:[#allocation7 + $0x34] sm:$0xf]
    %v177 = vld [vmem:[#allocation7 + $0x38] sm:$0xf]
    %v178 = vld [vmem:[#allocation7 + $0x3c] sm:$0xf]
    %v195 = vunpack.c.l.b16 %v163
    %v196 = vunpack.c.l.b16 %v164
    %v197 = vunpack.c.l.b16 %v165
    %v198 = vunpack.c.l.b16 %v166
    %v199 = vunpack.c.l.b16 %v167
    %v200 = vunpack.c.l.b16 %v168
    %v201 = vunpack.c.l.b16 %v169
    %v202 = vunpack.c.l.b16 %v170
    %v203 = vunpack.c.l.b16 %v171
    %v204 = vunpack.c.l.b16 %v172
    %v205 = vunpack.c.l.b16 %v173
    %v206 = vunpack.c.l.b16 %v174
    %v207 = vunpack.c.l.b16 %v175
    %v208 = vunpack.c.l.b16 %v176
    %v209 = vunpack.c.l.b16 %v177
    %v210 = vunpack.c.l.b16 %v178
    %v211 = vpack.c.b16 %v196, %v195
    %v212 = vpack.c.b16 %v198, %v197
    %v213 = vpack.c.b16 %v200, %v199
    %v214 = vpack.c.b16 %v202, %v201
    %v215 = vpack.c.b16 %v204, %v203
    %v216 = vpack.c.b16 %v206, %v205
    %v217 = vpack.c.b16 %v208, %v207
    %v218 = vpack.c.b16 %v210, %v209
    %227 = vmatprep.subr.bf16.mxu0 0
    %228 = vmatpush1.bf16.msra.mxu0 %v211
    %229 = vmatprep.subr.bf16.mxu0 0
    %230 = vmatpush1.bf16.msra.mxu0 %v212
    %231 = vmatprep.subr.bf16.mxu0 0
    %232 = vmatpush1.bf16.msra.mxu0 %v213
    %233 = vmatprep.subr.bf16.mxu0 0
    %234 = vmatpush1.bf16.msra.mxu0 %v214
    %235 = vmatprep.subr.bf16.mxu0 0
    %236 = vmatpush1.bf16.msra.mxu0 %v215
    %237 = vmatprep.subr.bf16.mxu0 0
    %238 = vmatpush1.bf16.msra.mxu0 %v216
    %239 = vmatprep.subr.bf16.mxu0 0
    %240 = vmatpush1.bf16.msra.mxu0 %v217
    %241 = vmatprep.subr.bf16.mxu0 0
    %242 = vmatpush1.bf16.msra.mxu0 %v218
    %243 = vmatprep.subr.bf16.mxu0 0
    %244 = vmatpush1.bf16.msra.mxu0 0
    %245 = vmatprep.subr.bf16.mxu0 0
    %246 = vmatpush1.bf16.msra.mxu0 0
    %247 = vmatprep.subr.bf16.mxu0 0
    %248 = vmatpush1.bf16.msra.mxu0 0
    %249 = vmatprep.subr.bf16.mxu0 0
    %250 = vmatpush1.bf16.msra.mxu0 0
    %251 = vmatprep.subr.bf16.mxu0 0
    %252 = vmatpush1.bf16.msra.mxu0 0
    %253 = vmatprep.subr.bf16.mxu0 0
    %254 = vmatpush1.bf16.msra.mxu0 0
    %255 = vmatprep.subr.bf16.mxu0 0
    %256 = vmatpush1.bf16.msra.mxu0 0
    %257 = vmatprep.subr.bf16.mxu0 0
    %258 = vmatpush1.bf16.msra.mxu0 0
    %259 = vmatprep.mubr.bf16.mxu0 0
    %260 = vmatmul.mubr.bf16.gmra.mrb[0].mxu0 %v162
    %v261 = vpop.f32.mrb[0].mxu0
    %v262 = vadd.f32 0.0, %v261
    %v263 = vpop.f32.mrb[0].mxu0
    %v264 = vpop.f32.mrb[0].mxu0
    %v265 = vpop.f32.mrb[0].mxu0
    %266 = vdwg.mxu0
    %v267 = vrsqrt.pop %v262
    %v268 = vmul.f32 %v262, %v267
    %vm269 = vcmp.eq.f32.partialorder %v262, inf
    %v270 = vsel %vm269, %v262, %v268
    %vm271 = vcmp.eq.f32.partialorder %v262, 0.0
    %v272 = vand.u32 %v262, 2147483648
    %v273 = vsel %vm271, %v272, %v270
    %v274 = vadd.f32 %v273, 1.0
    %v275 = vrcp.pop %v274
    %v276 = vmul.f32 %v156, %v275
    %v277 = vadd.f32 %v276, 1.0
    %v278 = vmul.f32 %v277, %v55
    %279 = vst [vmem:[#allocation8] sm:$0xff] %v278
    // Predicated region
    $region26: #{tpu_custom_call.1} parent=1 // pred_check
      _
    $region27: #{tpu_custom_call.1} parent=1 // pred_check_branch
      %281 = sbr.rel (0) target = $region29
    $region28: #{tpu_custom_call.1} parent=1 // pred_region
      %s283 = ssub.s32 128, 128
      %284 = vsyncadd [#allocation4], %s283
      %s286 = sshll.u32 [#allocation8], 4
      %s287 = int_to_ptr.vmem [resolvable:$true] %s286
      %289 = dma.vmem_to_hbm [thread:$0]  %s287, 128, %s3, [#allocation4]
    $region29: #{tpu_custom_call.1} parent=1 // pred_fallthru
      _
    // Predicated region
    $region30: #{tpu_custom_call.1} parent=1 // pred_check
      _
    $region31: #{tpu_custom_call.1} parent=1 // pred_check_branch
      %291 = sbr.rel (0) target = $region33
    $region32: #{tpu_custom_call.1} parent=1 // pred_region
      %292 = dma.done [#allocation4], 128
    $region33: #{tpu_custom_call.1} parent=1 // pred_fallthru
      _
    %293 = vsyncpa [#allocation3], 1
    %294 = vsyncpa [#allocation6], 1
    %295 = vsyncpa [#allocation4], 1

</llo_original>
